<compile_context>
chip_gen: v5e
topology: v5e:2x2
jax: 0.10.0
libtpu: 0.0.40
codegen_flags: <defaults>
</compile_context>

<pallas_src>
import numpy as np
import jax
import jax.numpy as jnp
from jax.experimental import pallas as pl
from jax.experimental.pallas import tpu as pltpu


_ACT_DTYPE = jnp.bfloat16   # inter-kernel activations in HBM (halves HBM traffic)
_MM_DTYPE = jnp.bfloat16    # MXU operand dtype (f32 accumulation kept)


def _cdiv(a, b):
    return (a + b - 1) // b


_VMEM_LIMIT_CACHE = None


def _vmem_limit_bytes():
    """Generation-conditional scoped-VMEM limit with a safe fallback."""
    global _VMEM_LIMIT_CACHE
    if _VMEM_LIMIT_CACHE is None:
        limit = 32 * 1024 * 1024
        try:
            cap = int(getattr(pltpu.get_tpu_info(), "vmem_capacity_bytes", 0))
            if cap > 0:
                # 3/4 of physical, capped at 100 MiB: ~48 MiB on v7x, ~96 MiB on v5e/v6e.
                limit = min(100 * 1024 * 1024, max(32 * 1024 * 1024, (cap * 3) // 4))
        except Exception:
            pass
        _VMEM_LIMIT_CACHE = int(limit)
    return _VMEM_LIMIT_CACHE


# ----------------------------- Pallas kernels -----------------------------

def _matmul_bias_kernel(p_ref, w_ref, b_ref, o_ref):
    # Patch-embedding conv as im2col matmul tile: (tm, K)bf16 @ (K, Cout)bf16 + bias(f32)
    acc = jnp.dot(p_ref[...], w_ref[...], preferred_element_type=jnp.float32)
    o_ref[...] = (acc + b_ref[...]).astype(o_ref.dtype)


def _erf(x):
    # Abramowitz & Stegun 7.1.26; max abs error ~1.5e-7.  Kept (instead of the
    # cheaper tanh-GELU) to stay close to HF ACT2FN["gelu"] exact-erf semantics;
    # the exp() lands on the EUP slot and the polynomial is VPU filler under the MXU.
    a1, a2, a3, a4, a5 = 0.254829592, -0.284496736, 1.421413741, -1.453152027, 1.061405429
    p = 0.3275911
    ax = jnp.abs(x)
    t = 1.0 / (1.0 + p * ax)
    poly = ((((a5 * t + a4) * t + a3) * t + a2) * t + a1) * t
    y = 1.0 - poly * jnp.exp(-ax * ax)
    return jnp.where(x >= 0, y, -y)


def _gelu_exact(x):
    return 0.5 * x * (1.0 + _erf(x * 0.7071067811865476))


def _gn_pool_residual_kernel(x_ref, g_ref, b_ref, ls_ref, invc_ref, o_ref):
    # Fused: y = GroupNorm1(x); out = x + ls1 * (AvgPool3x3_nopad(y) - y)
    # One block = one batch sample (H, W, C); grid over B is "parallel".
    _, H, W, C = x_ref.shape
    x = x_ref[0].astype(jnp.float32)                       # (H, W, C), math in f32

    # --- GroupNorm (1 group == whole sample), two-pass centered variance, eps=1e-5 ---
    inv_n = 1.0 / float(H * W * C)
    mean = jnp.sum(x) * inv_n
    xc = x - mean
    var = jnp.sum(xc * xc) * inv_n
    inv_std = jax.lax.rsqrt(var + 1e-5)
    y = xc * (inv_std * g_ref[...]) + b_ref[...]           # (H,W,C) * (1,C) broadcast

    # --- 3x3 average pool, stride 1, pad 1, count_include_pad=False (vectorized) ---
    # Vertical valid sums for all rows at once (shifted adds along H), then
    # horizontal valid sums (shifted adds along W), then one multiply by the
    # separable precomputed 1/(row_count*col_count) map.  No per-row loop / MXU.
    zr = jnp.zeros((1, W, C), jnp.float32)
    vs = y + jnp.concatenate([y[1:], zr], axis=0) + jnp.concatenate([zr, y[:-1]], axis=0)
    zc = jnp.zeros((H, 1, C), jnp.float32)
    hs = vs + jnp.concatenate([vs[:, 1:], zc], axis=1) + jnp.concatenate([zc, vs[:, :-1]], axis=1)
    pooled = hs * invc_ref[...]                            # (H,W,1) broadcast over lanes

    out = x + ls_ref[...] * (pooled - y)                   # residual + layer_scale_1 in f32
    o_ref[0] = out.astype(o_ref.dtype)                     # single dense block store (bf16)


def _gn_mlp_residual_kernel(x_ref, g_ref, bt_ref, w1_ref, b1_ref, w2_ref, b2_ref,
                            ls_ref, o_ref):
    # Fused: z = GroupNorm2(x); out = x + ls2 * (gelu(z @ W1 + b1) @ W2 + b2)
    # 1x1 convs == per-pixel channel matmuls on the (HW, C) view of one sample.
    _, M, C = x_ref.shape
    x = x_ref[0].astype(jnp.float32)                       # (HW, C), math in f32

    inv_n = 1.0 / float(M * C)
    mean = jnp.sum(x) * inv_n
    xc = x - mean
    var = jnp.sum(xc * xc) * inv_n
    inv_std = jax.lax.rsqrt(var + 1e-5)
    z = xc * (inv_std * g_ref[...]) + bt_ref[...]

    # MXU in bf16, f32 accumulation.
    h = jnp.dot(z.astype(w1_ref.dtype), w1_ref[...],
                preferred_element_type=jnp.float32) + b1_ref[...]
    h = _gelu_exact(h)
    m = jnp.dot(h.astype(w2_ref.dtype), w2_ref[...],
                preferred_element_type=jnp.float32) + b2_ref[...]
    o_ref[0] = (x + ls_ref[...] * m).astype(o_ref.dtype)   # single dense block store (bf16)


# ----------------------------- pallas_call wrappers -----------------------------

def pallas_matmul_bias(p, w, b, *, tm_max=512):
    """(M, K) @ (K, N) + bias, M-tiled with a parallel grid axis. bf16 in / bf16 out."""
    M, K = p.shape
    N = w.shape[1]
    # 8-aligned M tile; aim for >=2 blocks (v7x megacore) when M allows.
    tm = min(tm_max, max(8, 8 * _cdiv(_cdiv(M, 2), 8)))
    Mp = _cdiv(M, tm) * tm
    if Mp != M:
        p = jnp.pad(p, ((0, Mp - M), (0, 0)))
    out = pl.pallas_call(
        _matmul_bias_kernel,
        out_shape=jax.ShapeDtypeStruct((Mp, N), _ACT_DTYPE),
        grid=(Mp // tm,),
        in_specs=[pl.BlockSpec((tm, K), lambda i: (i, 0)),
                  pl.BlockSpec((K, N), lambda i: (0, 0)),
                  pl.BlockSpec((1, N), lambda i: (0, 0))],
        out_specs=pl.BlockSpec((tm, N), lambda i: (i, 0)),
        compiler_params=pltpu.CompilerParams(
            dimension_semantics=("parallel",),
            vmem_limit_bytes=_vmem_limit_bytes()),
    )(p.astype(_MM_DTYPE), w.astype(_MM_DTYPE), b.reshape(1, N).astype(jnp.float32))
    return out[:M]


def _inv_count_map(H, W):
    """(H, W, 1) f32 map of 1/(valid_rows * valid_cols) for a clipped 3x3 window."""
    r = (np.minimum(np.arange(H) + 1, H - 1) - np.maximum(np.arange(H) - 1, 0) + 1)
    c = (np.minimum(np.arange(W) + 1, W - 1) - np.maximum(np.arange(W) - 1, 0) + 1)
    cnt = r[:, None] * c[None, :]
    return jnp.asarray((1.0 / cnt)[..., None].astype(np.float32))


def pallas_gn_pool_residual(x, gamma, beta, ls1, inv_cnt):
    B, H, W, C = x.shape
    return pl.pallas_call(
        _gn_pool_residual_kernel,
        out_shape=jax.ShapeDtypeStruct((B, H, W, C), _ACT_DTYPE),
        grid=(B,),
        in_specs=[pl.BlockSpec((1, H, W, C), lambda b: (b, 0, 0, 0)),
                  pl.BlockSpec((1, C), lambda b: (0, 0)),
                  pl.BlockSpec((1, C), lambda b: (0, 0)),
                  pl.BlockSpec((1, C), lambda b: (0, 0)),
                  pl.BlockSpec((H, W, 1), lambda b: (0, 0, 0))],
        out_specs=pl.BlockSpec((1, H, W, C), lambda b: (b, 0, 0, 0)),
        compiler_params=pltpu.CompilerParams(
            dimension_semantics=("parallel",),
            vmem_limit_bytes=_vmem_limit_bytes()),
    )(x.astype(_ACT_DTYPE),
      gamma.reshape(1, C).astype(jnp.float32),
      beta.reshape(1, C).astype(jnp.float32),
      ls1.reshape(1, C).astype(jnp.float32),
      inv_cnt)


def pallas_gn_mlp_residual(x2d, gamma, beta, w1, b1, w2, b2, ls2):
    B, M, C = x2d.shape
    I = w1.shape[1]
    return pl.pallas_call(
        _gn_mlp_residual_kernel,
        out_shape=jax.ShapeDtypeStruct((B, M, C), _ACT_DTYPE),
        grid=(B,),
        in_specs=[pl.BlockSpec((1, M, C), lambda b: (b, 0, 0)),
                  pl.BlockSpec((1, C), lambda b: (0, 0)),
                  pl.BlockSpec((1, C), lambda b: (0, 0)),
                  pl.BlockSpec((C, I), lambda b: (0, 0)),
                  pl.BlockSpec((1, I), lambda b: (0, 0)),
                  pl.BlockSpec((I, C), lambda b: (0, 0)),
                  pl.BlockSpec((1, C), lambda b: (0, 0)),
                  pl.BlockSpec((1, C), lambda b: (0, 0))],
        out_specs=pl.BlockSpec((1, M, C), lambda b: (b, 0, 0)),
        compiler_params=pltpu.CompilerParams(
            dimension_semantics=("parallel",),
            vmem_limit_bytes=_vmem_limit_bytes()),
    )(x2d.astype(_ACT_DTYPE),
      gamma.reshape(1, C).astype(jnp.float32),
      beta.reshape(1, C).astype(jnp.float32),
      w1.astype(_MM_DTYPE), b1.reshape(1, I).astype(jnp.float32),
      w2.astype(_MM_DTYPE), b2.reshape(1, C).astype(jnp.float32),
      ls2.reshape(1, C).astype(jnp.float32))


# ----------------------------- glue: im2col for the patch-embedding conv -----------------------------

def _im2col(x, kh, kw, stride, pad):
    """x: (B, H, W, C) NHWC -> (B*Ho*Wo, kh*kw*C) patches in (ky, kx, c) order."""
    B, H, W, C = x.shape
    xp = jnp.pad(x, ((0, 0), (pad, pad), (pad, pad), (0, 0)))
    Ho = (H + 2 * pad - kh) // stride + 1
    Wo = (W + 2 * pad - kw) // stride + 1
    cols = []
    for ky in range(kh):
        for kx in range(kw):
            cols.append(xp[:, ky:ky + (Ho - 1) * stride + 1:stride,
                            kx:kx + (Wo - 1) * stride + 1:stride, :])
    patches = jnp.concatenate(cols, axis=-1)
    return patches.reshape(B * Ho * Wo, kh * kw * C), Ho, Wo


# ----------------------------- PoolFormerEncoder -----------------------------

CONFIG = dict(
    num_channels=4,
    num_encoder_blocks=2,
    depths=(1, 1),
    hidden_sizes=(16, 32),
    patch_sizes=(7, 3),
    strides=(4, 2),
    padding=(2, 1),
    pool_size=3,
    mlp_ratio=2.0,
    use_layer_scale=True,
    layer_scale_init_value=1e-5,
    hidden_act="gelu",
    drop_path_rate=0.0,
)


def init_params(key, cfg):
    """Deterministic synthetic parameters matching the module's shapes.
    Matmul weights are stored bf16 (MXU-native); norm / scale / bias params stay f32."""
    params = []
    cin = cfg["num_channels"]
    for i in range(cfg["num_encoder_blocks"]):
        cout = cfg["hidden_sizes"][i]
        k = cfg["patch_sizes"][i]
        key, k1, k2 = jax.random.split(key, 3)
        stage = {
            # conv weight stored as (kh, kw, Cin, Cout); a real PyTorch checkpoint
            # (Cout, Cin, kh, kw) would need transpose(2, 3, 1, 0) before reshape.
            "proj_w": (0.05 * jax.random.normal(k1, (k, k, cin, cout), jnp.float32)).astype(_MM_DTYPE),
            "proj_b": 0.02 * jax.random.normal(k2, (cout,), jnp.float32),
            "layers": [],
        }
        inter = int(cout * cfg["mlp_ratio"])
        for _ in range(cfg["depths"][i]):
            key, k3, k4, k5, k6 = jax.random.split(key, 5)
            stage["layers"].append({
                "gn1_w": jnp.ones((cout,), jnp.float32),
                "gn1_b": jnp.zeros((cout,), jnp.float32),
                "gn2_w": jnp.ones((cout,), jnp.float32),
                "gn2_b": jnp.zeros((cout,), jnp.float32),
                "ls1": cfg["layer_scale_init_value"] * jnp.ones((cout,), jnp.float32),
                "ls2": cfg["layer_scale_init_value"] * jnp.ones((cout,), jnp.float32),
                "w1": (0.05 * jax.random.normal(k3, (cout, inter), jnp.float32)).astype(_MM_DTYPE),
                "b1": 0.02 * jax.random.normal(k4, (inter,), jnp.float32),
                "w2": (0.05 * jax.random.normal(k5, (inter, cout), jnp.float32)).astype(_MM_DTYPE),
                "b2": 0.02 * jax.random.normal(k6, (cout,), jnp.float32),
            })
        params.append(stage)
        cin = cout
    return params


def poolformer_encoder_forward(pixel_values_nchw, params, cfg, output_hidden_states=False):
    """PoolFormerEncoder.forward (eval mode). Input NCHW f32, output NCHW f32.
    Intermediate activations between fused kernels are bf16 (HBM-bandwidth bound)."""
    x = jnp.transpose(pixel_values_nchw, (0, 2, 3, 1)).astype(_ACT_DTYPE)  # -> NHWC bf16
    all_hidden = []
    B = x.shape[0]
    for i, stage in enumerate(params):
        # PoolFormerEmbeddings: strided Conv2d as bf16 im2col (glue) + M-tiled MXU matmul.
        k = cfg["patch_sizes"][i]
        patches, Ho, Wo = _im2col(x, k, k, cfg["strides"][i], cfg["padding"][i])
        cout = cfg["hidden_sizes"][i]
        wf = stage["proj_w"].reshape(k * k * stage["proj_w"].shape[2], cout)
        x = pallas_matmul_bias(patches, wf, stage["proj_b"]).reshape(B, Ho, Wo, cout)

        inv_cnt = _inv_count_map(Ho, Wo)   # count_include_pad=False reciprocal counts
        for lyr in stage["layers"]:
            # token mixer (fused): x = x + ls1 * (avgpool(GN1(x)) - GN1(x))
            x = pallas_gn_pool_residual(x, lyr["gn1_w"], lyr["gn1_b"], lyr["ls1"], inv_cnt)
            # channel MLP (fused): x = x + ls2 * conv2(gelu(conv1(GN2(x))))
            x2 = pallas_gn_mlp_residual(x.reshape(B, Ho * Wo, cout),
                                        lyr["gn2_w"], lyr["gn2_b"],
                                        lyr["w1"], lyr["b1"], lyr["w2"], lyr["b2"],
                                        lyr["ls2"])
            x = x2.reshape(B, Ho, Wo, cout)

        if output_hidden_states:
            all_hidden.append(jnp.transpose(x, (0, 3, 1, 2)).astype(jnp.float32))

    last = jnp.transpose(x, (0, 3, 1, 2)).astype(jnp.float32)  # back to NCHW f32
    if output_hidden_states:
        return last, tuple(all_hidden)
    return last


if __name__ == "__main__":
    key = jax.random.PRNGKey(0)
    key, pk = jax.random.split(key)
    pixel_values = jax.random.normal(pk, (2, CONFIG["num_channels"], 16, 16), jnp.float32)
    params = init_params(jax.random.PRNGKey(1), CONFIG)

    out = poolformer_encoder_forward(pixel_values, params, CONFIG)
    out = jax.block_until_ready(out)

    # stage 0: 16 -> (16+4-7)//4+1 = 4 ; stage 1: 4 -> (4+2-3)//2+1 = 2
    assert out.shape == (2, CONFIG["hidden_sizes"][-1], 2, 2), out.shape
    assert bool(jnp.all(jnp.isfinite(out)))
    print("KERNEL_OK")
</pallas_src>

<mosaic_0001>
module attributes {stable_mosaic.version = 11 : i64} {
  func.func @_matmul_bias_kernel(%arg0: i32, %arg1: memref<16x196xbf16, #tpu.memory_space<vmem>>, %arg2: memref<196x16xbf16, #tpu.memory_space<vmem>>, %arg3: memref<1x16xf32, #tpu.memory_space<vmem>>, %arg4: memref<16x16xbf16, #tpu.memory_space<vmem>>) attributes {dimension_semantics = [#tpu.dimension_semantics<parallel>], iteration_bounds = array<i64: 2>, scalar_prefetch = 0 : i64, scratch_operands = 0 : i64, tpu.core_type = #tpu.core_type<tc>, window_params = [{transform_indices = @transform_0, window_bounds = array<i64: 16, 196>}, {pipeline_mode = #tpu.pipeline_mode<synchronous>, transform_indices = @transform_1, window_bounds = array<i64: 196, 16>}, {pipeline_mode = #tpu.pipeline_mode<synchronous>, transform_indices = @transform_2, window_bounds = array<i64: 1, 16>}, {transform_indices = @transform_3, window_bounds = array<i64: 16, 16>}]} {
    %c0 = arith.constant 0 : index
    %c0_0 = arith.constant 0 : index
    %0 = vector.load %arg1[%c0, %c0_0] : memref<16x196xbf16, #tpu.memory_space<vmem>>, vector<16x196xbf16>
    %c0_1 = arith.constant 0 : index
    %c0_2 = arith.constant 0 : index
    %1 = vector.load %arg2[%c0_1, %c0_2] : memref<196x16xbf16, #tpu.memory_space<vmem>>, vector<196x16xbf16>
    %cst = arith.constant dense<0.000000e+00> : vector<16x16xf32>
    %2 = tpu.matmul %0, %1, %cst {dimension_numbers = #tpu.dot_dimension_numbers<[1], [0], [0], [1], [0, 0, 1, 1], [], []>} : vector<16x196xbf16>, vector<196x16xbf16>, vector<16x16xf32> -> vector<16x16xf32>
    %c0_3 = arith.constant 0 : index
    %c0_4 = arith.constant 0 : index
    %3 = vector.load %arg3[%c0_3, %c0_4] : memref<1x16xf32, #tpu.memory_space<vmem>>, vector<1x16xf32>
    %4 = vector.broadcast %3 : vector<1x16xf32> to vector<16x16xf32>
    %5 = arith.addf %2, %4 : vector<16x16xf32>
    %6 = arith.truncf %5 : vector<16x16xf32> to vector<16x16xbf16>
    %c0_5 = arith.constant 0 : index
    %c0_6 = arith.constant 0 : index
    %7 = vector.load %arg4[%c0_5, %c0_6] : memref<16x16xbf16, #tpu.memory_space<vmem>>, vector<16x16xbf16>
    tpu.vector_store %arg4[%c0_5, %c0_6], %6 {strides = array<i32>} : memref<16x16xbf16, #tpu.memory_space<vmem>>, vector<16x16xbf16>,
    return
  }
  func.func @transform_0(%arg0: i32) -> (i32, i32) {
    %c0_i32 = arith.constant 0 : i32
    %c0_i32_0 = arith.constant 0 : i32
    return %arg0, %c0_i32 : i32, i32
  }
  func.func @transform_1(%arg0: i32) -> (i32, i32) {
    %c0_i32 = arith.constant 0 : i32
    %c0_i32_0 = arith.constant 0 : i32
    %c0_i32_1 = arith.constant 0 : i32
    return %c0_i32, %c0_i32_0 : i32, i32
  }
  func.func @transform_2(%arg0: i32) -> (i32, i32) {
    %c0_i32 = arith.constant 0 : i32
    %c0_i32_0 = arith.constant 0 : i32
    %c0_i32_1 = arith.constant 0 : i32
    return %c0_i32, %c0_i32_0 : i32, i32
  }
  func.func @transform_3(%arg0: i32) -> (i32, i32) {
    %c0_i32 = arith.constant 0 : i32
    %c0_i32_0 = arith.constant 0 : i32
    return %arg0, %c0_i32 : i32, i32
  }
}

</mosaic_0001>

<llo_original>
// kernel: tpu_custom_call.1
$region0: #{tpu_custom_call.1}
  #allocation0 [shape = 'u32[]', space=smem, size = 0x4, offset = 0x4, fixed_abs, tag = 'smem constant byte address 0x4 - core index']
  #allocation1 [shape = 'u32[72,128]{1,0:T(1,128)}', space=vmem, size = 0x9000, scoped, tag = 'internal scratch']
  %s0 = inlined_call_operand.vmem [shape: bf16[32,196], index: 0, kind: input, shape index: {}]
  %s1 = inlined_call_operand.vmem [shape: bf16[196,16], index: 1, kind: input, shape index: {}]
  %s2 = inlined_call_operand.vmem [shape: f32[1,16], index: 2, kind: input, shape index: {}]
  %s3 = inlined_call_operand.vmem [shape: bf16[32,16], index: 3, kind: output, shape index: {}]
  %s4 = sld [smem:[#allocation0]]
  $region45: #{tpu_custom_call.1} parent=0
    _
  %s6 = ssub.s32 1, %s4
  %s7 = scalar_select 0, %s6, %s4
  loop: start=0, step=1, limit=4
  $region2: #{tpu_custom_call.1} parent=0 // loop_pre_header
    _
  $region3: #{tpu_custom_call.1} parent=0 // loop_header
    %s9 = sphi 0, %s13
    %p10 = scmp.ge.s32.totalorder %s9, 4
    %s19 = sphi 0, %s21
    %s22 = sphi 0, %s19
    %s23 = sphi 0, %s22
    %s39 = sphi 0, %s23
    %s43 = sphi 0, %s43
    %s45 = sphi 0, %s43
    %s46 = sphi 0, %s45
    %s60 = sphi 0, %s46
    %s64 = sphi 0, %s64
    %s66 = sphi 0, %s64
    %s67 = sphi 0, %s66
    %s81 = sphi 0, %s67
    %s87 = sphi 0, %s89
    %s90 = sphi 0, %s87
    %s91 = sphi 0, %s90
    %s107 = sphi 0, %s91
  $region4: #{tpu_custom_call.1} parent=0 // loop_header_branch
    %12 = sbr.rel (%p10) target = $region8
  $region5: #{tpu_custom_call.1} parent=0 // loop_body
    %s14 = ssub.s32 %s9, 1
    %s15 = ssub.s32 %s9, 2
    %s16 = sadd.s32 %s9, 1
    %s17 = ssub.s32 %s9, %s16
    %p18 = scmp.eq.s32.totalorder %s17, 0
    %s20 = sadd.s32 %s19, 1
    %s21 = scalar_select %p18, %s19, %s20
    %p24 = pneg %p18
    %p25 = scmp.eq.s32.totalorder %s9, 1
    %p26 = por %p24, %p25
    %p27 = scmp.ne.s32.totalorder %s19, %s22
    %p28 = scmp.eq.s32.totalorder %s9, 0
    %p29 = por %p27, %p28
    %p30 = scmp.ne.s32.totalorder %s19, %s22
    %p31 = scmp.eq.s32.totalorder %s14, 1
    %p32 = por %p30, %p31
    %p33 = scmp.ne.s32.totalorder %s22, %s23
    %p34 = scmp.eq.s32.totalorder %s14, 0
    %p35 = por %p33, %p34
    %p36 = scmp.ne.s32.totalorder %s22, %s23
    %p37 = scmp.eq.s32.totalorder %s15, 1
    %p38 = por %p36, %p37
    %p40 = scmp.ne.s32.totalorder %s23, %s39
    %p41 = scmp.eq.s32.totalorder %s15, 0
    %p42 = por %p40, %p41
    %s44 = sadd.s32 %s43, 1
    %p47 = scmp.eq.s32.totalorder %s9, 1
    %p48 = scmp.ne.s32.totalorder %s43, %s45
    %p49 = scmp.eq.s32.totalorder %s9, 0
    %p50 = por %p48, %p49
    %p51 = scmp.ne.s32.totalorder %s43, %s45
    %p52 = scmp.eq.s32.totalorder %s14, 1
    %p53 = por %p51, %p52
    %p54 = scmp.ne.s32.totalorder %s45, %s46
    %p55 = scmp.eq.s32.totalorder %s14, 0
    %p56 = por %p54, %p55
    %p57 = scmp.ne.s32.totalorder %s45, %s46
    %p58 = scmp.eq.s32.totalorder %s15, 1
    %p59 = por %p57, %p58
    %p61 = scmp.ne.s32.totalorder %s46, %s60
    %p62 = scmp.eq.s32.totalorder %s15, 0
    %p63 = por %p61, %p62
    %s65 = sadd.s32 %s64, 1
    %p68 = scmp.eq.s32.totalorder %s9, 1
    %p69 = scmp.ne.s32.totalorder %s64, %s66
    %p70 = scmp.eq.s32.totalorder %s9, 0
    %p71 = por %p69, %p70
    %p72 = scmp.ne.s32.totalorder %s64, %s66
    %p73 = scmp.eq.s32.totalorder %s14, 1
    %p74 = por %p72, %p73
    %p75 = scmp.ne.s32.totalorder %s66, %s67
    %p76 = scmp.eq.s32.totalorder %s14, 0
    %p77 = por %p75, %p76
    %p78 = scmp.ne.s32.totalorder %s66, %s67
    %p79 = scmp.eq.s32.totalorder %s15, 1
    %p80 = por %p78, %p79
    %p82 = scmp.ne.s32.totalorder %s67, %s81
    %p83 = scmp.eq.s32.totalorder %s15, 0
    %p84 = por %p82, %p83
    %s85 = ssub.s32 %s9, %s16
    %p86 = scmp.eq.s32.totalorder %s85, 0
    %s88 = sadd.s32 %s87, 1
    %s89 = scalar_select %p86, %s87, %s88
    %p92 = pneg %p86
    %p93 = scmp.eq.s32.totalorder %s9, 1
    %p94 = por %p92, %p93
    %p95 = scmp.ne.s32.totalorder %s87, %s90
    %p96 = scmp.eq.s32.totalorder %s9, 0
    %p97 = por %p95, %p96
    %p98 = scmp.ne.s32.totalorder %s87, %s90
    %p99 = scmp.eq.s32.totalorder %s14, 1
    %p100 = por %p98, %p99
    %p101 = scmp.ne.s32.totalorder %s90, %s91
    %p102 = scmp.eq.s32.totalorder %s14, 0
    %p103 = por %p101, %p102
    %p104 = scmp.ne.s32.totalorder %s90, %s91
    %p105 = scmp.eq.s32.totalorder %s15, 1
    %p106 = por %p104, %p105
    %p108 = scmp.ne.s32.totalorder %s91, %s107
    %p109 = scmp.eq.s32.totalorder %s15, 0
    %p110 = por %p108, %p109
    %p111 = scmp.le.s32.totalorder 1, %s9
    %p112 = scmp.lt.s32.totalorder %s9, 3
    %p113 = pnand %p111, %p112
    %p114 = pneg %p113
    // Predicated region
    $region9: #{tpu_custom_call.1} parent=5 // pred_check
      _
    $region10: #{tpu_custom_call.1} parent=5 // pred_check_branch
      %116 = sbr.rel (%p113) target = $region12
    $region11: #{tpu_custom_call.1} parent=5 // pred_region
      %s117 = ssub.s32 %s9, 1
      // Predicated region
      $region13: #{tpu_custom_call.1} parent=11 // pred_check
        %p118 = pneg %p56
      $region14: #{tpu_custom_call.1} parent=11 // pred_check_branch
        %120 = sbr.rel (%p118) target = $region16
      $region15: #{tpu_custom_call.1} parent=11 // pred_region
        _
      $region16: #{tpu_custom_call.1} parent=11 // pred_fallthru
        _
      // Predicated region
      $region17: #{tpu_custom_call.1} parent=11 // pred_check
        %p121 = pneg %p77
      $region18: #{tpu_custom_call.1} parent=11 // pred_check_branch
        %123 = sbr.rel (%p121) target = $region20
      $region19: #{tpu_custom_call.1} parent=11 // pred_region
        _
      $region20: #{tpu_custom_call.1} parent=11 // pred_fallthru
        _
    $region12: #{tpu_custom_call.1} parent=5 // pred_fallthru
      _
    %p124 = scmp.lt.s32.totalorder %s9, 2
    // Predicated region
    $region21: #{tpu_custom_call.1} parent=5 // pred_check
      %p125 = pneg %p124
    $region22: #{tpu_custom_call.1} parent=5 // pred_check_branch
      %127 = sbr.rel (%p125) target = $region24
    $region23: #{tpu_custom_call.1} parent=5 // pred_region
      // Predicated region
      $region25: #{tpu_custom_call.1} parent=23 // pred_check
        %p128 = pneg %p29
      $region26: #{tpu_custom_call.1} parent=23 // pred_check_branch
        %130 = sbr.rel (%p128) target = $region28
      $region27: #{tpu_custom_call.1} parent=23 // pred_region
        %s131 = smul.u32 2, %s9
        %p132 = scmp.lt.s32.totalorder %s131, 3
        %s133 = scalar_select %p132, %s131, 3
        %s134 = smul.addr %s133, 2
        %s135 = smul.addr %s134, 4
        %s136 = scalar_lea.vmem %s0, %s135
        %s137 = smul.u32 2, %s9
      $region28: #{tpu_custom_call.1} parent=23 // pred_fallthru
        _
    $region24: #{tpu_custom_call.1} parent=5 // pred_fallthru
      _
    %p138 = scmp.le.s32.totalorder 1, %s9
    %p139 = scmp.lt.s32.totalorder %s9, 3
    %p140 = pnand %p138, %p139
    %p141 = pneg %p140
    // Predicated region
    $region29: #{tpu_custom_call.1} parent=5 // pred_check
      _
    $region30: #{tpu_custom_call.1} parent=5 // pred_check_branch
      %143 = sbr.rel (%p140) target = $region32
    $region31: #{tpu_custom_call.1} parent=5 // pred_region
      %s144 = ssub.s32 %s9, 1
      %s145 = smul.u32 2, %s14
      %p146 = scmp.lt.s32.totalorder %s145, 3
      %s147 = scalar_select %p146, %s145, 3
      %s148 = smul.addr %s147, 2
      %s149 = smul.addr %s148, 4
      %s150 = scalar_lea.vmem %s0, %s149
      %p151 = pneg %p35
      %p152 = pneg %p32
      %p153 = pneg %p56
      %p154 = pneg %p53
      %p155 = pneg %p77
      %p156 = pneg %p74
      %p157 = pneg %p103
      %p158 = pneg %p100
      %s159 = smul.u32 2, %s14
      %p160 = scmp.lt.s32.totalorder %s159, 3
      %s161 = scalar_select %p160, %s159, 3
      %s162 = smul.addr %s161, 4
      %s163 = scalar_lea.vmem %s3, %s162
      %s164 = smul.u32 2, %s14
      %p165 = scmp.lt.s32.totalorder %s164, 3
      %s166 = scalar_select %p165, %s164, 3
      %s167 = smul.addr %s166, 2
      %s168 = smul.addr %s167, 4
      %s169 = scalar_lea.vmem %s0, %s168
      %s170 = smul.u32 2, %s14
      %s171 = smul.u32 2, %s14
      %p172 = scmp.lt.s32.totalorder %s171, 3
      %s173 = scalar_select %p172, %s171, 3
      %s174 = smul.addr %s173, 4
      %s175 = scalar_lea.vmem %s3, %s174
      %s176 = smul.u32 2, %s14
      %v178 = vld [vmem:[%s169] sm:$0xff]
      %v179 = vld [vmem:[%s169 + $0x8] sm:$0xff]
      %v180 = vld [vmem:[%s1] sm:$0xf]
      %v181 = vld [vmem:[%s1 + $0x4] sm:$0xf]
      %v182 = vld [vmem:[%s1 + $0x8] sm:$0xf]
      %v183 = vld [vmem:[%s1 + $0xc] sm:$0xf]
      %v184 = vld [vmem:[%s1 + $0x10] sm:$0xf]
      %v185 = vld [vmem:[%s1 + $0x14] sm:$0xf]
      %v186 = vld [vmem:[%s1 + $0x18] sm:$0xf]
      %v187 = vld [vmem:[%s1 + $0x1c] sm:$0xf]
      %v188 = vld [vmem:[%s1 + $0x20] sm:$0xf]
      %v189 = vld [vmem:[%s1 + $0x24] sm:$0xf]
      %v190 = vld [vmem:[%s1 + $0x28] sm:$0xf]
      %v191 = vld [vmem:[%s1 + $0x2c] sm:$0xf]
      %v192 = vld [vmem:[%s1 + $0x30] sm:$0xf]
      %v193 = vld [vmem:[%s1 + $0x34] sm:$0xf]
      %v194 = vld [vmem:[%s1 + $0x38] sm:$0xf]
      %v195 = vld [vmem:[%s1 + $0x3c] sm:$0xf]
      %v196 = vld [vmem:[%s1 + $0x40] sm:$0xf]
      %v197 = vld [vmem:[%s1 + $0x44] sm:$0xf]
      %v198 = vld [vmem:[%s1 + $0x48] sm:$0xf]
      %v199 = vld [vmem:[%s1 + $0x4c] sm:$0xf]
      %v200 = vld [vmem:[%s1 + $0x50] sm:$0xf]
      %v201 = vld [vmem:[%s1 + $0x54] sm:$0xf]
      %v202 = vld [vmem:[%s1 + $0x58] sm:$0xf]
      %v203 = vld [vmem:[%s1 + $0x5c] sm:$0xf]
      %v204 = vld [vmem:[%s1 + $0x60] sm:$0x3]
      %v205 = vld [vmem:[%s2] sm:$0x1]
      %v207 = vperm.slane %v205, 0
      %v211 = vunpack.c.l.b16 %v178
      %v212 = vunpack.c.h.b16 %v178
      %v213 = vunpack.c.l.b16 %v179
      %v214 = vunpack.c.h.b16 %v179
      %v215 = vpack.c.b16 %v213, %v211
      %v216 = vpack.c.b16 %v214, %v212
      %v243 = vunpack.c.l.b16 %v180
      %v244 = vunpack.c.l.b16 %v181
      %v245 = vunpack.c.l.b16 %v182
      %v246 = vunpack.c.l.b16 %v183
      %v247 = vunpack.c.l.b16 %v184
      %v248 = vunpack.c.l.b16 %v185
      %v249 = vunpack.c.l.b16 %v186
      %v250 = vunpack.c.l.b16 %v187
      %v251 = vunpack.c.l.b16 %v188
      %v252 = vunpack.c.l.b16 %v189
      %v253 = vunpack.c.l.b16 %v190
      %v254 = vunpack.c.l.b16 %v191
      %v255 = vunpack.c.l.b16 %v192
      %v256 = vunpack.c.l.b16 %v193
      %v257 = vunpack.c.l.b16 %v194
      %v258 = vunpack.c.l.b16 %v195
      %v259 = vunpack.c.l.b16 %v196
      %v260 = vunpack.c.l.b16 %v197
      %v261 = vunpack.c.l.b16 %v198
      %v262 = vunpack.c.l.b16 %v199
      %v263 = vunpack.c.l.b16 %v200
      %v264 = vunpack.c.l.b16 %v201
      %v265 = vunpack.c.l.b16 %v202
      %v266 = vunpack.c.l.b16 %v203
      %v267 = vunpack.c.l.b16 %v204
      %v268 = vpack.c.b16 %v244, %v243
      %v269 = vpack.c.b16 %v246, %v245
      %v270 = vpack.c.b16 %v248, %v247
      %v271 = vpack.c.b16 %v250, %v249
      %v272 = vpack.c.b16 %v252, %v251
      %v273 = vpack.c.b16 %v254, %v253
      %v274 = vpack.c.b16 %v256, %v255
      %v275 = vpack.c.b16 %v258, %v257
      %v276 = vpack.c.b16 %v260, %v259
      %v277 = vpack.c.b16 %v262, %v261
      %v278 = vpack.c.b16 %v264, %v263
      %v279 = vpack.c.b16 %v266, %v265
      %v280 = vpack.c.b16 %v267, %v267
      %vm293 = vcmask 556032
      %v295 = vsel %vm293, %v216, 0
      %vm297 = vcmask 1041408
      %v299 = vsel %vm297, %v280, 0
      %301 = vmatpush.bf16.msra.mxu0 %v275
      %302 = vmatpush.bf16.msra.mxu0 %v274
      %303 = vmatpush.bf16.msra.mxu0 %v273
      %304 = vmatpush.bf16.msra.mxu0 %v272
      %305 = vmatpush.bf16.msra.mxu0 %v271
      %306 = vmatpush.bf16.msra.mxu0 %v270
      %307 = vmatpush.bf16.msra.mxu0 %v269
      %308 = vmatpush.bf16.msra.mxu0 %v268
      %309 = vmatmul.bf16.gmra.mxu0 %v215
      %v310 = vpop.f32.mrf.mxu0
      %v311 = vadd.f32 %v207, %v310
      %v312 = vpop.f32.mrf.mxu0
      %v313 = vadd.f32 %v207, %v312
      %314 = vdwg.mxu0
      %315 = vmatpush.bf16.msra.mxu0 0
      %316 = vmatpush.bf16.msra.mxu0 0
      %317 = vmatpush.bf16.msra.mxu0 0
      %318 = vmatpush.bf16.msra.mxu0 %v299
      %319 = vmatpush.bf16.msra.mxu0 %v279
      %320 = vmatpush.bf16.msra.mxu0 %v278
      %321 = vmatpush.bf16.msra.mxu0 %v277
      %322 = vmatpush.bf16.msra.mxu0 %v276
      %323 = vmatmul.bf16.gmra.mxu0 %v295
      %v324 = vpop.f32.mrf.mxu0
      %v325 = vadd.f32 %v311, %v324
      %v326 = vpop.f32.mrf.mxu0
      %v327 = vadd.f32 %v313, %v326
      %328 = vdwg.mxu0
      %v329 = vpack.c.bf16 %v325, %v325
      %v330 = vpack.c.bf16 %v327, %v327
      %vm331 = vcmask 125952
      %332 = vst.msk [vmem:[%s175] sm:$0xf] %vm331, %v329
      %333 = vst.msk [vmem:[%s175 + $0x4] sm:$0xf] %vm331, %v330
      %s334 = smul.u32 2, %s14
      %p335 = scmp.lt.s32.totalorder %s334, 3
      %s336 = scalar_select %p335, %s334, 3
      %s337 = smul.addr %s336, 4
      %s338 = scalar_lea.vmem %s3, %s337
      // Predicated region
      $region33: #{tpu_custom_call.1} parent=31 // pred_check
        %p339 = pneg %p100
      $region34: #{tpu_custom_call.1} parent=31 // pred_check_branch
        %341 = sbr.rel (%p339) target = $region36
      $region35: #{tpu_custom_call.1} parent=31 // pred_region
        %s342 = smul.u32 2, %s14
      $region36: #{tpu_custom_call.1} parent=31 // pred_fallthru
        _
    $region32: #{tpu_custom_call.1} parent=5 // pred_fallthru
      _
    %p343 = scmp.le.s32.totalorder 2, %s9
    // Predicated region
    $region37: #{tpu_custom_call.1} parent=5 // pred_check
      %p344 = pneg %p343
    $region38: #{tpu_custom_call.1} parent=5 // pred_check_branch
      %346 = sbr.rel (%p344) target = $region40
    $region39: #{tpu_custom_call.1} parent=5 // pred_region
      %s347 = ssub.s32 %s9, 2
      // Predicated region
      $region41: #{tpu_custom_call.1} parent=39 // pred_check
        %p348 = pneg %p106
      $region42: #{tpu_custom_call.1} parent=39 // pred_check_branch
        %350 = sbr.rel (%p348) target = $region44
      $region43: #{tpu_custom_call.1} parent=39 // pred_region
        %s351 = smul.u32 2, %s15
        %p352 = scmp.lt.s32.totalorder %s351, 3
        %s353 = scalar_select %p352, %s351, 3
        %s354 = smul.addr %s353, 4
        %s355 = scalar_lea.vmem %s3, %s354
      $region44: #{tpu_custom_call.1} parent=39 // pred_fallthru
        _
    $region40: #{tpu_custom_call.1} parent=5 // pred_fallthru
      _
  $region6: #{tpu_custom_call.1} parent=0 // loop_footer
    %s13 = sadd.s32 1, %s9
  $region7: #{tpu_custom_call.1} parent=0 // loop_footer_branch
    %8 = sbr.rel target = $region3
  $region8: #{tpu_custom_call.1} parent=0 // loop_exit
    _

</llo_original>
